<compile_context>
chip_gen: v7x
topology: tpu7x:2x2x1
jax: 0.10.0
libtpu: 0.0.40
codegen_flags: <defaults>
</compile_context>

<pallas_src>
import functools

import jax
import jax.numpy as jnp
from jax.experimental import pallas as pl
from jax.experimental.pallas import tpu as pltpu

EPS = 1e-5  # nn.BatchNorm2d default


def _bnneck_kernel(x_ref, x00_ref, gamma_ref, beta_ref, out_ref,
                   sum_ref, sumsq_ref, *, total_count):
    # x_ref:     (n_tile, c_tile, HW)  streamed activation slab
    # x00_ref:   (N, c_tile)           features[:, c_tile, 0, 0] (resident)
    # gamma_ref: (1, c_tile), beta_ref: (1, c_tile)
    # out_ref:   (N, c_tile)           resident; written on last step only
    # sum_ref, sumsq_ref: (c_tile, HW) f32 lane-dense accumulators (scratch)
    nb = pl.program_id(1)

    @pl.when(nb == 0)
    def _init():
        sum_ref[...] = jnp.zeros_like(sum_ref)
        sumsq_ref[...] = jnp.zeros_like(sumsq_ref)

    # Accumulate with VALU adds only; one (c_tile, HW) slab per batch row so
    # the f32 cast temporaries stay one slab deep (helps bf16 on small VMEM).
    s = sum_ref[...]
    sq = sumsq_ref[...]
    for i in range(x_ref.shape[0]):            # static n_tile, unrolled
        xi = x_ref[i].astype(jnp.float32)      # (c_tile, HW)
        s = s + xi
        sq = sq + xi * xi
    sum_ref[...] = s
    sumsq_ref[...] = sq

    @pl.when(nb == pl.num_programs(1) - 1)
    def _finalize():
        inv_m = 1.0 / total_count
        # Single cross-lane (XLU) reduce per channel tile, done once here.
        tot = jnp.sum(sum_ref[...], axis=1, keepdims=True)      # (c_tile, 1)
        totsq = jnp.sum(sumsq_ref[...], axis=1, keepdims=True)  # (c_tile, 1)
        mean = tot * inv_m
        var = jnp.maximum(totsq * inv_m - mean * mean, 0.0)     # biased, clamped
        inv_std = jax.lax.rsqrt(var + EPS)                      # (c_tile, 1)
        scale = gamma_ref[...].astype(jnp.float32) * inv_std.T  # (1, c_tile)
        shift = beta_ref[...].astype(jnp.float32) - mean.T * scale
        out_ref[...] = (x00_ref[...].astype(jnp.float32) * scale
                        + shift).astype(out_ref.dtype)


def _tpu_vmem_and_cores():
    """Best-effort query of per-core VMEM capacity and TensorCore count."""
    vmem_cap = 128 * 1024 * 1024
    try:
        vmem_cap = int(pltpu.get_tpu_info().vmem_capacity_bytes)
    except Exception:
        pass
    num_tc = 1
    try:
        if "v7" in jax.devices()[0].device_kind.lower():
            num_tc = 2
    except Exception:
        pass
    if vmem_cap <= (64 << 20):      # v7x-class parts: 64 MiB VMEM, 2 TCs/chip
        num_tc = max(num_tc, 2)
    return vmem_cap, num_tc


def _pick_tiles(N, C, HW, in_isz, out_isz, *, block_cap, budget, min_c_splits,
                max_n_tile=32):
    """Choose (c_tile, n_tile) so blocks are a few MiB and everything fits VMEM."""
    # Channel tile must be a multiple of 128 dividing C (lane-dense output
    # stores) or the full C when C is not 128-aligned.
    if C % 128 == 0:
        cands = [d for d in range(128, C + 1, 128) if C % d == 0]
    else:
        cands = [C]
    if min_c_splits > 1:
        split = [d for d in cands if C // d >= min_c_splits]
        if split:                   # feed both TensorCores when C allows it
            cands = split

    def fixed_bytes(ct):
        return (2 * ct * HW * 4          # sum + sumsq f32 accumulators
                + 2 * N * ct * out_isz   # resident output block (slack x2)
                + N * ct * in_isz        # resident x00 block
                + 4 * ct * 4)            # gamma / beta

    c_tile = None
    for ct in sorted(cands, reverse=True):
        if fixed_bytes(ct) + 2 * ct * HW * in_isz <= budget:
            c_tile = ct
            break
    if c_tile is None:
        c_tile = min(cands)

    # Batch tile: largest divisor of N whose x block stays under the cap and
    # whose double-buffered footprint fits the budget (capped so the unrolled
    # in-kernel slab loop stays small).
    n_tile = 1
    for d in range(1, min(N, max_n_tile) + 1):
        if N % d:
            continue
        blk = d * c_tile * HW * in_isz
        if blk <= block_cap and fixed_bytes(c_tile) + 2 * blk <= budget:
            n_tile = d
    return c_tile, n_tile


def bnneck_head(features, gamma, beta):
    """features: (N, C, H, W); gamma/beta: (C,) -> (N, C) =
    BatchNorm2d(features)[..., 0, 0] with batch (training-mode) statistics."""
    N, C, H, W = features.shape
    HW = H * W
    in_isz = jnp.dtype(features.dtype).itemsize
    out_isz = in_isz

    vmem_cap, num_tc = _tpu_vmem_and_cores()
    block_cap = (6 << 20) if vmem_cap <= (64 << 20) else (8 << 20)
    budget = vmem_cap // 2

    c_tile, n_tile = _pick_tiles(N, C, HW, in_isz, out_isz,
                                 block_cap=block_cap, budget=budget,
                                 min_c_splits=num_tc)
    # TODO(synk): HW == 1 (post-GAP BNneck) would be better served by a
    # lane-dense (N_tile, C_tile) layout with C on lanes; and C % 128 != 0
    # with very large C*HW would want an extra HW reduction grid axis.

    # Layout plumbing only — no HBM-materializing transpose.
    x = features.reshape(N, C, HW)              # contiguous view, free
    x00 = features[:, :, 0, 0]                  # tiny (N, C) strided slice
    g = gamma.reshape(1, C)
    b = beta.reshape(1, C)

    usage = (2 * n_tile * c_tile * HW * in_isz      # x, double-buffered
             + 2 * c_tile * HW * 4                  # accumulators
             + 2 * N * c_tile * out_isz             # resident output
             + N * c_tile * in_isz                  # resident x00
             + 4 * c_tile * 4)                      # gamma / beta
    vmem_limit = min(max(16 << 20, usage + usage // 2 + (2 << 20)),
                     int(0.75 * vmem_cap))

    kernel = functools.partial(_bnneck_kernel, total_count=float(N * HW))
    grid = (C // c_tile, N // n_tile)               # reduction (batch) axis last

    cost = pl.CostEstimate(
        flops=5 * N * C * HW + 16 * C + 2 * N * C,
        transcendentals=C,
        bytes_accessed=(N * C * HW + 2 * N * C + 2 * C) * in_isz
                       + N * C * out_isz,
    )

    return pl.pallas_call(
        kernel,
        out_shape=jax.ShapeDtypeStruct((N, C), features.dtype),
        grid_spec=pltpu.PrefetchScalarGridSpec(
            num_scalar_prefetch=0,
            grid=grid,
            in_specs=[
                # (n_tile, c_tile, HW) slab of batch rows for this step.
                pl.BlockSpec((n_tile, c_tile, HW), lambda c, n: (n, c, 0)),
                # resident channel-tile slices (constant index across n).
                pl.BlockSpec((N, c_tile), lambda c, n: (0, c)),
                pl.BlockSpec((1, c_tile), lambda c, n: (0, c)),
                pl.BlockSpec((1, c_tile), lambda c, n: (0, c)),
            ],
            out_specs=pl.BlockSpec((N, c_tile), lambda c, n: (0, c)),
            scratch_shapes=[
                pltpu.VMEM((c_tile, HW), jnp.float32),   # per-channel sum
                pltpu.VMEM((c_tile, HW), jnp.float32),   # per-channel sum(x^2)
            ],
        ),
        compiler_params=pltpu.CompilerParams(
            dimension_semantics=("parallel", "arbitrary"),
            vmem_limit_bytes=vmem_limit,
        ),
        cost_estimate=cost,
    )(x, x00, g, b)


def bnneck_head_ref(features, gamma, beta):
    """Pure-JAX reference (training-mode BatchNorm2d + [..., 0, 0])."""
    mean = jnp.mean(features, axis=(0, 2, 3), keepdims=True)
    var = jnp.mean((features - mean) ** 2, axis=(0, 2, 3), keepdims=True)
    y = (features - mean) / jnp.sqrt(var + EPS)
    y = y * gamma[None, :, None, None] + beta[None, :, None, None]
    return y[..., 0, 0]


if __name__ == "__main__":
    key = jax.random.PRNGKey(0)
    N, C, H, W = 2, 4, 16, 16  # in_feat = C = 4

    x = jax.random.normal(key, (N, C, H, W), dtype=jnp.float32)

    # weights_init_kaiming for BatchNorm: weight <- 1.0, bias <- 0.0
    # (bias.requires_grad_(False) only freezes training; forward still adds it).
    gamma = jnp.ones((C,), dtype=jnp.float32)
    beta = jnp.zeros((C,), dtype=jnp.float32)

    out = jax.block_until_ready(bnneck_head(x, gamma, beta))
    ref = bnneck_head_ref(x, gamma, beta)
    assert out.shape == (N, C), out.shape
    assert jnp.allclose(out, ref, atol=1e-5, rtol=1e-5), (out, ref)

    # Exercise the affine path with non-trivial gamma/beta too.
    k1, k2 = jax.random.split(key)
    gamma2 = jax.random.normal(k1, (C,), dtype=jnp.float32)
    beta2 = jax.random.normal(k2, (C,), dtype=jnp.float32)
    out2 = jax.block_until_ready(bnneck_head(x, gamma2, beta2))
    ref2 = bnneck_head_ref(x, gamma2, beta2)
    assert jnp.allclose(out2, ref2, atol=1e-5, rtol=1e-5), (out2, ref2)

    # TODO(synk): BatchNorm2d running_mean/running_var momentum update is not
    # reproduced (only the forward output is required here).
    print("KERNEL_OK")
</pallas_src>

<mosaic_0001>
module attributes {stable_mosaic.version = 11 : i64} {
  func.func @_bnneck_kernel(%arg0: i32, %arg1: i32, %arg2: memref<2x4x256xf32, #tpu.memory_space<vmem>>, %arg3: memref<2x4xf32, #tpu.memory_space<vmem>>, %arg4: memref<1x4xf32, #tpu.memory_space<vmem>>, %arg5: memref<1x4xf32, #tpu.memory_space<vmem>>, %arg6: memref<2x4xf32, #tpu.memory_space<vmem>>, %arg7: memref<4x256xf32, #tpu.memory_space<vmem>>, %arg8: memref<4x256xf32, #tpu.memory_space<vmem>>) attributes {dimension_semantics = [#tpu.dimension_semantics<parallel>, #tpu.dimension_semantics<arbitrary>], iteration_bounds = array<i64: 1, 1>, scalar_prefetch = 0 : i64, scratch_operands = 2 : i64, tpu.core_type = #tpu.core_type<tc>, window_params = [{transform_indices = @transform_0, window_bounds = array<i64: 2, 4, 256>}, {transform_indices = @transform_1, window_bounds = array<i64: 2, 4>}, {transform_indices = @transform_2, window_bounds = array<i64: 1, 4>}, {transform_indices = @transform_3, window_bounds = array<i64: 1, 4>}, {transform_indices = @transform_4, window_bounds = array<i64: 2, 4>}]} {
    %c0_i32 = arith.constant 0 : i32
    %0 = arith.cmpi eq, %arg1, %c0_i32 : i32
    %1 = arith.extui %0 : i1 to i32
    %c0_i32_0 = arith.constant 0 : i32
    %2 = arith.cmpi ne, %1, %c0_i32_0 : i32
    scf.if %2 {
      %cst = arith.constant 0.000000e+00 : f32
      %20 = vector.broadcast %cst : f32 to vector<4x256xf32>
      %c0_15 = arith.constant 0 : index
      %c0_16 = arith.constant 0 : index
      %21 = vector.load %arg7[%c0_15, %c0_16] : memref<4x256xf32, #tpu.memory_space<vmem>>, vector<4x256xf32>
      tpu.vector_store %arg7[%c0_15, %c0_16], %20 {strides = array<i32>} : memref<4x256xf32, #tpu.memory_space<vmem>>, vector<4x256xf32>,
      %cst_17 = arith.constant 0.000000e+00 : f32
      %22 = vector.broadcast %cst_17 : f32 to vector<4x256xf32>
      %c0_18 = arith.constant 0 : index
      %c0_19 = arith.constant 0 : index
      %23 = vector.load %arg8[%c0_18, %c0_19] : memref<4x256xf32, #tpu.memory_space<vmem>>, vector<4x256xf32>
      tpu.vector_store %arg8[%c0_18, %c0_19], %22 {strides = array<i32>} : memref<4x256xf32, #tpu.memory_space<vmem>>, vector<4x256xf32>,
    } else {
    }
    %c0 = arith.constant 0 : index
    %c0_1 = arith.constant 0 : index
    %3 = vector.load %arg7[%c0, %c0_1] : memref<4x256xf32, #tpu.memory_space<vmem>>, vector<4x256xf32>
    %c0_2 = arith.constant 0 : index
    %c0_3 = arith.constant 0 : index
    %4 = vector.load %arg8[%c0_2, %c0_3] : memref<4x256xf32, #tpu.memory_space<vmem>>, vector<4x256xf32>
    %c0_4 = arith.constant 0 : index
    %c0_5 = arith.constant 0 : index
    %c0_6 = arith.constant 0 : index
    %5 = vector.load %arg2[%c0_4, %c0_5, %c0_6] : memref<2x4x256xf32, #tpu.memory_space<vmem>>, vector<1x4x256xf32>
    %6 = vector.shape_cast %5 : vector<1x4x256xf32> to vector<4x256xf32>
    %7 = arith.addf %3, %6 : vector<4x256xf32>
    %8 = arith.mulf %6, %6 : vector<4x256xf32>
    %9 = arith.addf %4, %8 : vector<4x256xf32>
    %c1 = arith.constant 1 : index
    %c0_7 = arith.constant 0 : index
    %c0_8 = arith.constant 0 : index
    %10 = vector.load %arg2[%c1, %c0_7, %c0_8] : memref<2x4x256xf32, #tpu.memory_space<vmem>>, vector<1x4x256xf32>
    %11 = vector.shape_cast %10 : vector<1x4x256xf32> to vector<4x256xf32>
    %12 = arith.addf %7, %11 : vector<4x256xf32>
    %13 = arith.mulf %11, %11 : vector<4x256xf32>
    %14 = arith.addf %9, %13 : vector<4x256xf32>
    %c0_9 = arith.constant 0 : index
    %c0_10 = arith.constant 0 : index
    %15 = vector.load %arg7[%c0_9, %c0_10] : memref<4x256xf32, #tpu.memory_space<vmem>>, vector<4x256xf32>
    tpu.vector_store %arg7[%c0_9, %c0_10], %12 {strides = array<i32>} : memref<4x256xf32, #tpu.memory_space<vmem>>, vector<4x256xf32>,
    %c0_11 = arith.constant 0 : index
    %c0_12 = arith.constant 0 : index
    %16 = vector.load %arg8[%c0_11, %c0_12] : memref<4x256xf32, #tpu.memory_space<vmem>>, vector<4x256xf32>
    tpu.vector_store %arg8[%c0_11, %c0_12], %14 {strides = array<i32>} : memref<4x256xf32, #tpu.memory_space<vmem>>, vector<4x256xf32>,
    %c0_i32_13 = arith.constant 0 : i32
    %17 = arith.cmpi eq, %arg1, %c0_i32_13 : i32
    %18 = arith.extui %17 : i1 to i32
    %c0_i32_14 = arith.constant 0 : i32
    %19 = arith.cmpi ne, %18, %c0_i32_14 : i32
    scf.if %19 {
      %c0_15 = arith.constant 0 : index
      %c0_16 = arith.constant 0 : index
      %20 = vector.load %arg7[%c0_15, %c0_16] : memref<4x256xf32, #tpu.memory_space<vmem>>, vector<4x256xf32>
      %cst = arith.constant dense<0.000000e+00> : vector<4xf32>
      %21 = vector.multi_reduction <add>, %20, %cst [1] : vector<4x256xf32> to vector<4xf32>
      %22 = vector.shape_cast %21 : vector<4xf32> to vector<4x1xf32>
      %c0_17 = arith.constant 0 : index
      %c0_18 = arith.constant 0 : index
      %23 = vector.load %arg8[%c0_17, %c0_18] : memref<4x256xf32, #tpu.memory_space<vmem>>, vector<4x256xf32>
      %cst_19 = arith.constant dense<0.000000e+00> : vector<4xf32>
      %24 = vector.multi_reduction <add>, %23, %cst_19 [1] : vector<4x256xf32> to vector<4xf32>
      %25 = vector.shape_cast %24 : vector<4xf32> to vector<4x1xf32>
      %cst_20 = arith.constant 0.001953125 : f32
      %26 = vector.broadcast %cst_20 : f32 to vector<4x1xf32>
      %27 = arith.mulf %22, %26 : vector<4x1xf32>
      %cst_21 = arith.constant 0.001953125 : f32
      %28 = vector.broadcast %cst_21 : f32 to vector<4x1xf32>
      %29 = arith.mulf %25, %28 : vector<4x1xf32>
      %30 = arith.mulf %27, %27 : vector<4x1xf32>
      %31 = arith.subf %29, %30 : vector<4x1xf32>
      %cst_22 = arith.constant 0.000000e+00 : f32
      %32 = vector.broadcast %cst_22 : f32 to vector<4x1xf32>
      %33 = arith.maximumf %31, %32 : vector<4x1xf32>
      %cst_23 = arith.constant 9.99999974E-6 : f32
      %34 = vector.broadcast %cst_23 : f32 to vector<4x1xf32>
      %35 = arith.addf %33, %34 : vector<4x1xf32>
      %36 = math.rsqrt %35 : vector<4x1xf32>
      %c0_24 = arith.constant 0 : index
      %c0_25 = arith.constant 0 : index
      %37 = vector.load %arg4[%c0_24, %c0_25] : memref<1x4xf32, #tpu.memory_space<vmem>>, vector<1x4xf32>
      %38 = tpu.transpose %36, [1, 0] : vector<4x1xf32> -> vector<1x4xf32>
      %39 = arith.mulf %37, %38 : vector<1x4xf32>
      %c0_26 = arith.constant 0 : index
      %c0_27 = arith.constant 0 : index
      %40 = vector.load %arg5[%c0_26, %c0_27] : memref<1x4xf32, #tpu.memory_space<vmem>>, vector<1x4xf32>
      %41 = tpu.transpose %27, [1, 0] : vector<4x1xf32> -> vector<1x4xf32>
      %42 = arith.mulf %41, %39 : vector<1x4xf32>
      %43 = arith.subf %40, %42 : vector<1x4xf32>
      %c0_28 = arith.constant 0 : index
      %c0_29 = arith.constant 0 : index
      %44 = vector.load %arg3[%c0_28, %c0_29] : memref<2x4xf32, #tpu.memory_space<vmem>>, vector<2x4xf32>
      %45 = vector.broadcast %39 : vector<1x4xf32> to vector<2x4xf32>
      %46 = arith.mulf %44, %45 : vector<2x4xf32>
      %47 = vector.broadcast %43 : vector<1x4xf32> to vector<2x4xf32>
      %48 = arith.addf %46, %47 : vector<2x4xf32>
      %c0_30 = arith.constant 0 : index
      %c0_31 = arith.constant 0 : index
      %49 = vector.load %arg6[%c0_30, %c0_31] : memref<2x4xf32, #tpu.memory_space<vmem>>, vector<2x4xf32>
      tpu.vector_store %arg6[%c0_30, %c0_31], %48 {strides = array<i32>} : memref<2x4xf32, #tpu.memory_space<vmem>>, vector<2x4xf32>,
    } else {
    }
    return
  }
  func.func @transform_0(%arg0: i32, %arg1: i32) -> (i32, i32, i32) {
    %c0_i32 = arith.constant 0 : i32
    %c0_i32_0 = arith.constant 0 : i32
    return %arg1, %arg0, %c0_i32 : i32, i32, i32
  }
  func.func @transform_1(%arg0: i32, %arg1: i32) -> (i32, i32) {
    %c0_i32 = arith.constant 0 : i32
    %c0_i32_0 = arith.constant 0 : i32
    return %c0_i32, %arg0 : i32, i32
  }
  func.func @transform_2(%arg0: i32, %arg1: i32) -> (i32, i32) {
    %c0_i32 = arith.constant 0 : i32
    %c0_i32_0 = arith.constant 0 : i32
    return %c0_i32, %arg0 : i32, i32
  }
  func.func @transform_3(%arg0: i32, %arg1: i32) -> (i32, i32) {
    %c0_i32 = arith.constant 0 : i32
    %c0_i32_0 = arith.constant 0 : i32
    return %c0_i32, %arg0 : i32, i32
  }
  func.func @transform_4(%arg0: i32, %arg1: i32) -> (i32, i32) {
    %c0_i32 = arith.constant 0 : i32
    %c0_i32_0 = arith.constant 0 : i32
    return %c0_i32, %arg0 : i32, i32
  }
}

</mosaic_0001>

<llo_original>
// kernel: tpu_custom_call.1
$region0: #{tpu_custom_call.1}
  #allocation0 [shape = 'u32[]', space=smem, size = 0x4, offset = 0x4, fixed_abs, tag = 'smem constant byte address 0x4 - core index']
  #allocation1 [shape = 'u32[144,128]{1,0:T(1,128)}', space=vmem, size = 0x12000, scoped, tag = 'internal scratch']
  #allocation2 [shape = 'f32[4,256]{1,0:T(4,128)}', space=vmem, size = 0x1000, scoped, tag = 'scratch operand']
  #allocation3 [shape = 'f32[4,256]{1,0:T(4,128)}', space=vmem, size = 0x1000, scoped, tag = 'scratch operand']
  %s0 = inlined_call_operand.hbm [shape: f32[2,4,256], index: 0, kind: input, shape index: {}]
  %s1 = inlined_call_operand.vmem [shape: f32[2,4], index: 1, kind: input, shape index: {}]
  %s2 = inlined_call_operand.vmem [shape: f32[1,4], index: 2, kind: input, shape index: {}]
  %s3 = inlined_call_operand.vmem [shape: f32[1,4], index: 3, kind: input, shape index: {}]
  %s4 = inlined_call_operand.hbm [shape: f32[2,4], index: 4, kind: output, shape index: {}]
  %s5 = sld [smem:[#allocation0]]
  $region38: #{tpu_custom_call.1} parent=0
    _
  %s7 = ssub.s32 1, %s5
  %s8 = scalar_select 0, %s7, %s5
  $region1: #{tpu_custom_call.1} parent=0
    #allocation4 [shape = 'u8[8192]{0}', space=vmem, size = 0x2000, scoped, tag = 'input window, operand 0, single buffered']
    #allocation5 [shape = 's32[1]{0}', space=sflag, size = 0x4, scoped, tag = 'scoped memory for tpu_custom_call.1']
    #allocation6 [shape = 's32[1]{0}', space=sflag, size = 0x4, scoped, tag = 'scoped memory for tpu_custom_call.1']
    #allocation7 [shape = 'u8[1024]{0}', space=vmem, size = 0x400, scoped, tag = 'output window, operand 0, single buffered']
    %9 = vsyncpa [#allocation5], 0
    %10 = vsyncpa [#allocation6], 0
    // Predicated region
    $region2: #{tpu_custom_call.1} parent=1 // pred_check
      _
    $region3: #{tpu_custom_call.1} parent=1 // pred_check_branch
      %12 = sbr.rel (0) target = $region5
    $region4: #{tpu_custom_call.1} parent=1 // pred_region
      %s14 = ssub.s32 256, 256
      %15 = vsyncadd [#allocation5], %s14
      %s16 = sshll.u32 [#allocation4], 4
      %s17 = int_to_ptr.vmem [resolvable:$true] %s16
      %22 = dma.hbm_to_vmem [thread:$0]  %s0, 256, %s17, [#allocation5], 128, 128, 8
    $region5: #{tpu_custom_call.1} parent=1 // pred_fallthru
      _
    // Predicated region
    $region6: #{tpu_custom_call.1} parent=1 // pred_check
      _
    $region7: #{tpu_custom_call.1} parent=1 // pred_check_branch
      %24 = sbr.rel (0) target = $region9
    $region8: #{tpu_custom_call.1} parent=1 // pred_region
      _
    $region9: #{tpu_custom_call.1} parent=1 // pred_fallthru
      _
    // Predicated region
    $region10: #{tpu_custom_call.1} parent=1 // pred_check
      _
    $region11: #{tpu_custom_call.1} parent=1 // pred_check_branch
      %26 = sbr.rel (0) target = $region13
    $region12: #{tpu_custom_call.1} parent=1 // pred_region
      _
    $region13: #{tpu_custom_call.1} parent=1 // pred_fallthru
      _
    // Predicated region
    $region14: #{tpu_custom_call.1} parent=1 // pred_check
      _
    $region15: #{tpu_custom_call.1} parent=1 // pred_check_branch
      %28 = sbr.rel (0) target = $region17
    $region16: #{tpu_custom_call.1} parent=1 // pred_region
      _
    $region17: #{tpu_custom_call.1} parent=1 // pred_fallthru
      _
    // Predicated region
    $region18: #{tpu_custom_call.1} parent=1 // pred_check
      _
    $region19: #{tpu_custom_call.1} parent=1 // pred_check_branch
      %30 = sbr.rel (0) target = $region21
    $region20: #{tpu_custom_call.1} parent=1 // pred_region
      %31 = dma.done [#allocation5], 256
    $region21: #{tpu_custom_call.1} parent=1 // pred_fallthru
      _
    %p32 = scmp.eq.s32.totalorder 0, 0
    // Predicated region
    $region22: #{tpu_custom_call.1} parent=1 // pred_check
      %p33 = pneg %p32
    $region23: #{tpu_custom_call.1} parent=1 // pred_check_branch
      %35 = sbr.rel (%p33) target = $region25
    $region24: #{tpu_custom_call.1} parent=1 // pred_region
      %36 = vst [vmem:[#allocation2] sm:$0xff] 0.0
      %37 = vst [vmem:[#allocation3] sm:$0xff] 0.0
    $region25: #{tpu_custom_call.1} parent=1 // pred_fallthru
      _
    %v38 = vld [vmem:[#allocation2] sm:$0xff]
    %v39 = vld [vmem:[#allocation3] sm:$0xff]
    %v40 = vld [vmem:[#allocation4] sm:$0xff]
    %v41 = vadd.f32 %v38, %v40
    %v42 = vmul.f32 %v40, %v40
    %v43 = vadd.f32 %v39, %v42
    %s44 = scalar_lea.vmem [#allocation4], 8
    %v45 = vld [vmem:[%s44] sm:$0xff]
    %v46 = vadd.f32 %v41, %v45
    %v47 = vmul.f32 %v45, %v45
    %v48 = vadd.f32 %v43, %v47
    %49 = vst [vmem:[#allocation2] sm:$0xff] %v46
    %50 = vst [vmem:[#allocation3] sm:$0xff] %v48
    // Predicated region
    $region26: #{tpu_custom_call.1} parent=1 // pred_check
      %p51 = pneg %p32
    $region27: #{tpu_custom_call.1} parent=1 // pred_check_branch
      %53 = sbr.rel (%p51) target = $region29
    $region28: #{tpu_custom_call.1} parent=1 // pred_region
      %v54 = vld [vmem:[#allocation2] sm:$0xff]
      %v56 = vcombine.high %v54, %v54
      %vm58 = vcmask 1043456
      %v59 = vsel %vm58, %v54, 0.0
      %v60 = vsel %vm58, %v56, 0.0
      %v61 = vadd.f32 %v59, %v60
      %62 = vadd.xlane.f32.xlu0 %v61
      %v63 = vpop.xlane.xlu0 %62
      %v64 = vld [vmem:[#allocation3] sm:$0xff]
      %v66 = vcombine.high %v64, %v64
      %v68 = vsel %vm58, %v64, 0.0
      %v69 = vsel %vm58, %v66, 0.0
      %v70 = vadd.f32 %v68, %v69
      %71 = vadd.xlane.f32.xlu0 %v70
      %v72 = vpop.xlane.xlu0 %71
      %v73 = vmul.f32 %v63, 0.001953125
      %v74 = vmul.f32 %v72, 0.001953125
      %v75 = vmul.f32 %v73, %v73
      %v76 = vsub.f32 %v74, %v75
      %v77 = vmax.f32 %v76, 0.0
      %v78 = vadd.f32 %v77, 1e-05
      %v79 = vrsqrt.pop %v78
      %v80 = vld [vmem:[%s2] sm:$0x1]
      %81 = vxpose.xlu0.b32.start [1/16] %v79, 128
      %82 = vxpose.xlu0.b32.cont [2/16] 0.0, 128
      %83 = vxpose.xlu0.b32.cont [3/16] 0.0, 128
      %84 = vxpose.xlu0.b32.cont [4/16] 0.0, 128
      %85 = vxpose.xlu0.b32.cont [5/16] 0.0, 128
      %86 = vxpose.xlu0.b32.cont [6/16] 0.0, 128
      %87 = vxpose.xlu0.b32.cont [7/16] 0.0, 128
      %88 = vxpose.xlu0.b32.cont [8/16] 0.0, 128
      %89 = vxpose.xlu0.b32.cont [9/16] 0.0, 128
      %90 = vxpose.xlu0.b32.cont [10/16] 0.0, 128
      %91 = vxpose.xlu0.b32.cont [11/16] 0.0, 128
      %92 = vxpose.xlu0.b32.cont [12/16] 0.0, 128
      %93 = vxpose.xlu0.b32.cont [13/16] 0.0, 128
      %94 = vxpose.xlu0.b32.cont [14/16] 0.0, 128
      %95 = vxpose.xlu0.b32.cont [15/16] 0.0, 128
      %96 = vxpose.xlu0.b32.end [16/16] 0.0, 128
      %v97 = vpop.trf.xlu0
      %v98 = vpop.trf.xlu0
      %v99 = vpop.trf.xlu0
      %v100 = vpop.trf.xlu0
      %v101 = vpop.trf.xlu0
      %v102 = vpop.trf.xlu0
      %v103 = vpop.trf.xlu0
      %v104 = vpop.trf.xlu0
      %v105 = vpop.trf.xlu0
      %v106 = vpop.trf.xlu0
      %v107 = vpop.trf.xlu0
      %v108 = vpop.trf.xlu0
      %v109 = vpop.trf.xlu0
      %v110 = vpop.trf.xlu0
      %v111 = vpop.trf.xlu0
      %v112 = vpop.trf.xlu0
      %v113 = vmul.f32 %v80, %v97
      %v114 = vld [vmem:[%s3] sm:$0x1]
      %115 = vxpose.xlu0.b32.start [1/16] %v73, 128
      %116 = vxpose.xlu0.b32.cont [2/16] 0.0, 128
      %117 = vxpose.xlu0.b32.cont [3/16] 0.0, 128
      %118 = vxpose.xlu0.b32.cont [4/16] 0.0, 128
      %119 = vxpose.xlu0.b32.cont [5/16] 0.0, 128
      %120 = vxpose.xlu0.b32.cont [6/16] 0.0, 128
      %121 = vxpose.xlu0.b32.cont [7/16] 0.0, 128
      %122 = vxpose.xlu0.b32.cont [8/16] 0.0, 128
      %123 = vxpose.xlu0.b32.cont [9/16] 0.0, 128
      %124 = vxpose.xlu0.b32.cont [10/16] 0.0, 128
      %125 = vxpose.xlu0.b32.cont [11/16] 0.0, 128
      %126 = vxpose.xlu0.b32.cont [12/16] 0.0, 128
      %127 = vxpose.xlu0.b32.cont [13/16] 0.0, 128
      %128 = vxpose.xlu0.b32.cont [14/16] 0.0, 128
      %129 = vxpose.xlu0.b32.cont [15/16] 0.0, 128
      %130 = vxpose.xlu0.b32.end [16/16] 0.0, 128
      %v131 = vpop.trf.xlu0
      %v132 = vpop.trf.xlu0
      %v133 = vpop.trf.xlu0
      %v134 = vpop.trf.xlu0
      %v135 = vpop.trf.xlu0
      %v136 = vpop.trf.xlu0
      %v137 = vpop.trf.xlu0
      %v138 = vpop.trf.xlu0
      %v139 = vpop.trf.xlu0
      %v140 = vpop.trf.xlu0
      %v141 = vpop.trf.xlu0
      %v142 = vpop.trf.xlu0
      %v143 = vpop.trf.xlu0
      %v144 = vpop.trf.xlu0
      %v145 = vpop.trf.xlu0
      %v146 = vpop.trf.xlu0
      %v147 = vmul.f32 %v131, %v113
      %v148 = vsub.f32 %v114, %v147
      %v149 = vld [vmem:[%s1] sm:$0x3]
      %v151 = vlaneseq
      %v152 = vshrl.u32 %v151, 7
      %v153 = vsub.s32 0, %v152
      %v154 = vrot.slane %v113, %v153
      %v156 = vmul.f32 %v149, %v154
      %v158 = vlaneseq
      %v159 = vshrl.u32 %v158, 7
      %v160 = vsub.s32 0, %v159
      %v161 = vrot.slane %v148, %v160
      %v163 = vadd.f32 %v156, %v161
      %vm164 = vcmask 25600
      %165 = vst.msk [vmem:[#allocation7] sm:$0x3] %vm164, %v163
    $region29: #{tpu_custom_call.1} parent=1 // pred_fallthru
      _
    // Predicated region
    $region30: #{tpu_custom_call.1} parent=1 // pred_check
      _
    $region31: #{tpu_custom_call.1} parent=1 // pred_check_branch
      %167 = sbr.rel (0) target = $region33
    $region32: #{tpu_custom_call.1} parent=1 // pred_region
      %s169 = ssub.s32 32, 32
      %170 = vsyncadd [#allocation6], %s169
      %s172 = sshll.u32 [#allocation7], 4
      %s173 = int_to_ptr.vmem [resolvable:$true] %s172
      %175 = dma.vmem_to_hbm [thread:$0]  %s173, 32, %s4, [#allocation6]
    $region33: #{tpu_custom_call.1} parent=1 // pred_fallthru
      _
    // Predicated region
    $region34: #{tpu_custom_call.1} parent=1 // pred_check
      _
    $region35: #{tpu_custom_call.1} parent=1 // pred_check_branch
      %177 = sbr.rel (0) target = $region37
    $region36: #{tpu_custom_call.1} parent=1 // pred_region
      %178 = dma.done [#allocation6], 32
    $region37: #{tpu_custom_call.1} parent=1 // pred_fallthru
      _
    %179 = vsyncpa [#allocation5], 1
    %180 = vsyncpa [#allocation6], 1

</llo_original>
